<compile_context>
chip_gen: v7x
topology: tpu7x:2x2x1
jax: 0.10.0
libtpu: 0.0.40
codegen_flags: <defaults>
</compile_context>

<pallas_src>
import jax
import jax.numpy as jnp
from jax.experimental import pallas as pl
from jax.experimental.pallas import tpu as pltpu


def _round_up(a, b):
    return (a + b - 1) // b * b


def _cdiv(a, b):
    return (a + b - 1) // b


# ---------------------------------------------------------------------------
# Stage 1: h = x @ W^T + b   (row-tiled, lane-dense compute_dtype output)
# ---------------------------------------------------------------------------
def _make_linear_kernel(n_rows, tile_rows, mask_rows):
    def kernel(x_ref, wt_ref, b_ref, h_ref):
        x = x_ref[...].astype(wt_ref.dtype)
        h = jnp.dot(x, wt_ref[...], preferred_element_type=jnp.float32)
        h = h + b_ref[...]
        if mask_rows:
            # Zero padded rows (>= n_rows) so stage 2 only ever multiplies
            # finite, deterministic values from the padding region.
            row = (pl.program_id(0) * tile_rows
                   + jax.lax.broadcasted_iota(jnp.int32, h.shape, 0))
            h = jnp.where(row < n_rows, h, 0.0)
        h_ref[...] = h.astype(h_ref.dtype)
    return kernel


# ---------------------------------------------------------------------------
# Stage 2: out = adj @ h   (rows parallel, K reduction last, acc in out block)
# ---------------------------------------------------------------------------
def _make_spmm_kernel(n_cols, tile_k, h_resident, mask_cols):
    def kernel(adj_ref, h_ref, out_ref):
        k = pl.program_id(1)

        @pl.when(k == 0)
        def _():
            out_ref[...] = jnp.zeros_like(out_ref)

        a = adj_ref[...]
        if mask_cols:
            # Boundary k-tile: columns >= n_cols were never DMA'd (stale VMEM
            # garbage).  A select forces them to exact 0 (NaN/Inf proof).
            col = (k * tile_k
                   + jax.lax.broadcasted_iota(jnp.int32, a.shape, 1))
            a = jnp.where(col < n_cols, a, 0.0)
        # Native-dtype adj tile -> compute dtype on the VPU; hides under the
        # HBM-bound adj DMA.
        a = a.astype(h_ref.dtype)

        if h_resident:
            off = pl.multiple_of(k * tile_k, tile_k)
            h = h_ref[pl.ds(off, tile_k), :]
        else:
            h = h_ref[...]

        out_ref[...] += jnp.dot(a, h, preferred_element_type=jnp.float32)
    return kernel


def gcn_conv(x, adj, weight, bias, *, tile_m=512, tile_k=1024,
             compute_dtype=jnp.bfloat16):
    """x: [N, F_in], adj: [N, N] (streamed in its native dtype),
    weight: [F_out, F_in], bias: [F_out].  Returns f32 [N, F_out]."""
    N, f_in = x.shape
    f_out = weight.shape[0]
    assert adj.shape == (N, N)

    cd = jnp.dtype(compute_dtype)
    f_out_pad = _round_up(f_out, 128)

    # ---- tile selection (shrink for small graphs; keep >=2 row tiles) ------
    tile_k = max(128, _round_up(min(tile_k, _round_up(N, 128)), 128))
    tile_m = max(8, _round_up(min(tile_m, _round_up(N, 8)), 8))
    if _cdiv(N, tile_m) < 2 and tile_m > 8:
        # v7x megacore: 2 balanced row tiles instead of one padded-up tile.
        tile_m = max(8, _round_up(_cdiv(N, 2), 8))
    n_row_tiles = _cdiv(N, tile_m)
    n_k_pad = _round_up(N, tile_k)
    n_k_tiles = n_k_pad // tile_k

    # Stage-1 row tile must divide n_k_pad (tile_k is a multiple of 128).
    tile_s1 = min(tile_k, 512)
    while tile_k % tile_s1:
        tile_s1 //= 2
    n_s1_tiles = n_k_pad // tile_s1

    # ---- VMEM budget / h residency decision (v7x 64 MiB safe) --------------
    adj_blk = 2 * tile_m * tile_k * adj.dtype.itemsize      # double-buffered
    out_blk = 2 * tile_m * f_out_pad * 4
    h_bytes = n_k_pad * f_out_pad * cd.itemsize
    h_resident = (adj_blk + out_blk + 2 * h_bytes) <= (20 << 20)
    h_blk = 2 * h_bytes if h_resident else 2 * tile_k * f_out_pad * cd.itemsize
    vmem_need = adj_blk + out_blk + h_blk
    vmem_limit = int(min(max(2 * vmem_need, 32 << 20), 48 << 20))

    # ---- tiny glue (weights / bias / x only; adj is NOT touched) -----------
    wt = jnp.zeros((f_in, f_out_pad), compute_dtype).at[:, :f_out].set(
        weight.T.astype(compute_dtype))
    b2 = jnp.zeros((1, f_out_pad), jnp.float32).at[:, :f_out].set(
        bias.astype(jnp.float32))
    x_p = jnp.zeros((n_k_pad, f_in), compute_dtype).at[:N, :].set(
        x.astype(compute_dtype))

    # ---- stage 1: h = x @ W^T + b ------------------------------------------
    linear_kernel = _make_linear_kernel(
        n_rows=N, tile_rows=tile_s1, mask_rows=(n_k_pad != N))
    h = pl.pallas_call(
        linear_kernel,
        out_shape=jax.ShapeDtypeStruct((n_k_pad, f_out_pad), compute_dtype),
        grid_spec=pltpu.PrefetchScalarGridSpec(
            num_scalar_prefetch=0,
            grid=(n_s1_tiles,),
            in_specs=[
                pl.BlockSpec((tile_s1, f_in), lambda i: (i, 0)),
                pl.BlockSpec((f_in, f_out_pad), lambda i: (0, 0)),
                pl.BlockSpec((1, f_out_pad), lambda i: (0, 0)),
            ],
            out_specs=pl.BlockSpec((tile_s1, f_out_pad), lambda i: (i, 0)),
        ),
        compiler_params=pltpu.CompilerParams(
            dimension_semantics=("parallel",)),
        cost_estimate=pl.CostEstimate(
            flops=2 * n_k_pad * f_in * f_out_pad,
            transcendentals=0,
            bytes_accessed=(n_k_pad * f_in * cd.itemsize
                            + f_in * f_out_pad * cd.itemsize
                            + n_k_pad * f_out_pad * cd.itemsize)),
    )(x_p, wt, b2)

    # ---- stage 2: out = adj @ h ---------------------------------------------
    spmm_kernel = _make_spmm_kernel(
        n_cols=N, tile_k=tile_k, h_resident=h_resident,
        mask_cols=(N % tile_k != 0))
    if h_resident:
        h_spec = pl.BlockSpec((n_k_pad, f_out_pad), lambda i, k: (0, 0))
        h_reads = 1
    else:
        h_spec = pl.BlockSpec((tile_k, f_out_pad), lambda i, k: (k, 0))
        h_reads = n_row_tiles

    out_p = pl.pallas_call(
        spmm_kernel,
        out_shape=jax.ShapeDtypeStruct((N, f_out_pad), jnp.float32),
        grid_spec=pltpu.PrefetchScalarGridSpec(
            num_scalar_prefetch=0,
            grid=(n_row_tiles, n_k_tiles),
            in_specs=[
                pl.BlockSpec((tile_m, tile_k), lambda i, k: (i, k)),
                h_spec,
            ],
            out_specs=pl.BlockSpec((tile_m, f_out_pad), lambda i, k: (i, 0)),
        ),
        compiler_params=pltpu.CompilerParams(
            dimension_semantics=("parallel", "arbitrary"),
            vmem_limit_bytes=vmem_limit),
        cost_estimate=pl.CostEstimate(
            flops=2 * N * n_k_pad * f_out_pad,
            transcendentals=0,
            bytes_accessed=(N * N * adj.dtype.itemsize
                            + h_reads * n_k_pad * f_out_pad * cd.itemsize
                            + N * f_out_pad * 4)),
    )(adj, h)

    return out_p[:, :f_out]


def init_params(key, in_features, out_features):
    # nn.init.xavier_uniform_(weight, gain=1.414); bias filled with 0.
    gain = 1.414
    bound = gain * (6.0 / (in_features + out_features)) ** 0.5
    weight = jax.random.uniform(
        key, (out_features, in_features), jnp.float32, minval=-bound, maxval=bound)
    bias = jnp.zeros((out_features,), jnp.float32)
    return weight, bias


if __name__ == "__main__":
    N, in_features, out_features = 64, 32, 16
    dropout = 0.5  # unused in eval-mode forward

    key = jax.random.PRNGKey(0)
    kx, kadj, kw = jax.random.split(key, 3)

    x = jax.random.normal(kx, (N, in_features), jnp.float32)
    # symmetric row-normalized-ish dense adjacency
    a = (jax.random.uniform(kadj, (N, N)) < 0.1).astype(jnp.float32)
    adj = a + a.T + jnp.eye(N, dtype=jnp.float32)
    adj = adj / jnp.sum(adj, axis=1, keepdims=True)

    weight, bias = init_params(kw, in_features, out_features)

    out = gcn_conv(x, adj, weight, bias)
    out = jax.block_until_ready(out)
    assert out.shape == (N, out_features)

    # Tight check vs a reference that replicates the kernel's bf16-operand /
    # f32-accumulate numerics (adj rounded to bf16 in-kernel).
    xb = x.astype(jnp.bfloat16).astype(jnp.float32)
    wb = weight.astype(jnp.bfloat16).astype(jnp.float32)
    ab = adj.astype(jnp.bfloat16).astype(jnp.float32)
    h_ref = (xb @ wb.T + bias).astype(jnp.bfloat16).astype(jnp.float32)
    ref_bf16 = ab @ h_ref
    assert jnp.allclose(out, ref_bf16, rtol=2e-3, atol=2e-3)

    # Loose check vs the pure-f32 PyTorch-module semantics (bf16 compute error).
    ref_f32 = adj @ (x @ weight.T + bias)
    assert jnp.allclose(out, ref_f32, rtol=5e-2, atol=5e-2)

    print("KERNEL_OK")
</pallas_src>

<mosaic_0001>
module attributes {stable_mosaic.version = 11 : i64} {
  func.func @kernel(%arg0: i32, %arg1: memref<128x32xbf16, #tpu.memory_space<vmem>>, %arg2: memref<32x128xbf16, #tpu.memory_space<vmem>>, %arg3: memref<1x128xf32, #tpu.memory_space<vmem>>, %arg4: memref<128x128xbf16, #tpu.memory_space<vmem>>) attributes {dimension_semantics = [#tpu.dimension_semantics<parallel>], iteration_bounds = array<i64: 1>, scalar_prefetch = 0 : i64, scratch_operands = 0 : i64, tpu.core_type = #tpu.core_type<tc>, window_params = [{transform_indices = @transform_0, window_bounds = array<i64: 128, 32>}, {pipeline_mode = #tpu.pipeline_mode<synchronous>, transform_indices = @transform_1, window_bounds = array<i64: 32, 128>}, {pipeline_mode = #tpu.pipeline_mode<synchronous>, transform_indices = @transform_2, window_bounds = array<i64: 1, 128>}, {transform_indices = @transform_3, window_bounds = array<i64: 128, 128>}]} {
    %c0 = arith.constant 0 : index
    %c0_0 = arith.constant 0 : index
    %0 = vector.load %arg1[%c0, %c0_0] : memref<128x32xbf16, #tpu.memory_space<vmem>>, vector<128x32xbf16>
    %c0_1 = arith.constant 0 : index
    %c0_2 = arith.constant 0 : index
    %1 = vector.load %arg2[%c0_1, %c0_2] : memref<32x128xbf16, #tpu.memory_space<vmem>>, vector<32x128xbf16>
    %cst = arith.constant dense<0.000000e+00> : vector<128x128xf32>
    %2 = tpu.matmul %0, %1, %cst {dimension_numbers = #tpu.dot_dimension_numbers<[1], [0], [0], [1], [0, 0, 1, 1], [], []>} : vector<128x32xbf16>, vector<32x128xbf16>, vector<128x128xf32> -> vector<128x128xf32>
    %c0_3 = arith.constant 0 : index
    %c0_4 = arith.constant 0 : index
    %3 = vector.load %arg3[%c0_3, %c0_4] : memref<1x128xf32, #tpu.memory_space<vmem>>, vector<1x128xf32>
    %4 = vector.broadcast %3 : vector<1x128xf32> to vector<128x128xf32>
    %5 = arith.addf %2, %4 : vector<128x128xf32>
    %c128_i32 = arith.constant 128 : i32
    %6 = arith.muli %arg0, %c128_i32 : i32
    %7 = tpu.iota {dimensions = array<i32: 0>} : vector<128x128xi32>
    %8 = vector.broadcast %6 : i32 to vector<128x128xi32>
    %9 = arith.addi %8, %7 : vector<128x128xi32>
    %c64_i32 = arith.constant 64 : i32
    %10 = vector.broadcast %c64_i32 : i32 to vector<128x128xi32>
    %11 = arith.cmpi slt, %9, %10 : vector<128x128xi32>
    %cst_5 = arith.constant 0.000000e+00 : f32
    %12 = vector.broadcast %cst_5 : f32 to vector<128x128xf32>
    %13 = arith.select %11, %5, %12 : vector<128x128xi1>, vector<128x128xf32>
    %14 = arith.truncf %13 : vector<128x128xf32> to vector<128x128xbf16>
    %c0_6 = arith.constant 0 : index
    %c0_7 = arith.constant 0 : index
    %15 = vector.load %arg4[%c0_6, %c0_7] : memref<128x128xbf16, #tpu.memory_space<vmem>>, vector<128x128xbf16>
    tpu.vector_store %arg4[%c0_6, %c0_7], %14 {strides = array<i32>} : memref<128x128xbf16, #tpu.memory_space<vmem>>, vector<128x128xbf16>,
    return
  }
  func.func @transform_0(%arg0: i32) -> (i32, i32) {
    %c0_i32 = arith.constant 0 : i32
    %c0_i32_0 = arith.constant 0 : i32
    return %arg0, %c0_i32 : i32, i32
  }
  func.func @transform_1(%arg0: i32) -> (i32, i32) {
    %c0_i32 = arith.constant 0 : i32
    %c0_i32_0 = arith.constant 0 : i32
    %c0_i32_1 = arith.constant 0 : i32
    return %c0_i32, %c0_i32_0 : i32, i32
  }
  func.func @transform_2(%arg0: i32) -> (i32, i32) {
    %c0_i32 = arith.constant 0 : i32
    %c0_i32_0 = arith.constant 0 : i32
    %c0_i32_1 = arith.constant 0 : i32
    return %c0_i32, %c0_i32_0 : i32, i32
  }
  func.func @transform_3(%arg0: i32) -> (i32, i32) {
    %c0_i32 = arith.constant 0 : i32
    %c0_i32_0 = arith.constant 0 : i32
    return %arg0, %c0_i32 : i32, i32
  }
}

</mosaic_0001>

<llo_original>
// kernel: tpu_custom_call.1
$region0: #{tpu_custom_call.1}
  #allocation0 [shape = 'u32[]', space=smem, size = 0x4, offset = 0x4, fixed_abs, tag = 'smem constant byte address 0x4 - core index']
  #allocation1 [shape = 'u32[144,128]{1,0:T(1,128)}', space=vmem, size = 0x12000, scoped, tag = 'internal scratch']
  %s0 = inlined_call_operand.vmem [shape: bf16[128,32], index: 0, kind: input, shape index: {}]
  %s1 = inlined_call_operand.vmem [shape: bf16[32,128], index: 1, kind: input, shape index: {}]
  %s2 = inlined_call_operand.vmem [shape: f32[1,128], index: 2, kind: input, shape index: {}]
  %s3 = inlined_call_operand.hbm [shape: bf16[128,128], index: 3, kind: output, shape index: {}]
  %s4 = sld [smem:[#allocation0]]
  $region22: #{tpu_custom_call.1} parent=0
    _
  %s6 = ssub.s32 1, %s4
  %s7 = scalar_select 0, %s6, %s4
  $region1: #{tpu_custom_call.1} parent=0
    #allocation2 [shape = 'u8[32768]{0}', space=vmem, size = 0x8000, scoped, tag = 'output window, operand 0, single buffered']
    #allocation3 [shape = 's32[1]{0}', space=sflag, size = 0x4, scoped, tag = 'scoped memory for tpu_custom_call.1']
    %8 = vsyncpa [#allocation3], 0
    // Predicated region
    $region2: #{tpu_custom_call.1} parent=1 // pred_check
      _
    $region3: #{tpu_custom_call.1} parent=1 // pred_check_branch
      %10 = sbr.rel (0) target = $region5
    $region4: #{tpu_custom_call.1} parent=1 // pred_region
      _
    $region5: #{tpu_custom_call.1} parent=1 // pred_fallthru
      _
    // Predicated region
    $region6: #{tpu_custom_call.1} parent=1 // pred_check
      _
    $region7: #{tpu_custom_call.1} parent=1 // pred_check_branch
      %12 = sbr.rel (0) target = $region9
    $region8: #{tpu_custom_call.1} parent=1 // pred_region
      _
    $region9: #{tpu_custom_call.1} parent=1 // pred_fallthru
      _
    // Predicated region
    $region10: #{tpu_custom_call.1} parent=1 // pred_check
      _
    $region11: #{tpu_custom_call.1} parent=1 // pred_check_branch
      %14 = sbr.rel (0) target = $region13
    $region12: #{tpu_custom_call.1} parent=1 // pred_region
      _
    $region13: #{tpu_custom_call.1} parent=1 // pred_fallthru
      _
    %v16 = vld [vmem:[%s0] sm:$0xf]
    %v17 = vld [vmem:[%s0 + $0x4] sm:$0xf]
    %v18 = vld [vmem:[%s0 + $0x8] sm:$0xf]
    %v19 = vld [vmem:[%s0 + $0xc] sm:$0xf]
    %v20 = vld [vmem:[%s0 + $0x10] sm:$0xf]
    %v21 = vld [vmem:[%s0 + $0x14] sm:$0xf]
    %v22 = vld [vmem:[%s0 + $0x18] sm:$0xf]
    %v23 = vld [vmem:[%s0 + $0x1c] sm:$0xf]
    %v24 = vld [vmem:[%s0 + $0x20] sm:$0xf]
    %v25 = vld [vmem:[%s0 + $0x24] sm:$0xf]
    %v26 = vld [vmem:[%s0 + $0x28] sm:$0xf]
    %v27 = vld [vmem:[%s0 + $0x2c] sm:$0xf]
    %v28 = vld [vmem:[%s0 + $0x30] sm:$0xf]
    %v29 = vld [vmem:[%s0 + $0x34] sm:$0xf]
    %v30 = vld [vmem:[%s0 + $0x38] sm:$0xf]
    %v31 = vld [vmem:[%s0 + $0x3c] sm:$0xf]
    %v32 = vld [vmem:[%s1] sm:$0xf]
    %v33 = vld [vmem:[%s1 + $0x4] sm:$0xf]
    %v34 = vld [vmem:[%s1 + $0x8] sm:$0xf]
    %v35 = vld [vmem:[%s1 + $0xc] sm:$0xf]
    %v36 = vld [vmem:[%s2] sm:$0x1]
    %v38 = vlaneseq
    %v39 = vshrl.u32 %v38, 7
    %v40 = vsub.s32 0, %v39
    %v41 = vrot.slane %v36, %v40
    %v59 = vunpack.c.l.b16 %v16
    %v60 = vunpack.c.l.b16 %v17
    %v61 = vunpack.c.l.b16 %v18
    %v62 = vunpack.c.l.b16 %v19
    %v63 = vunpack.c.l.b16 %v20
    %v64 = vunpack.c.l.b16 %v21
    %v65 = vunpack.c.l.b16 %v22
    %v66 = vunpack.c.l.b16 %v23
    %v67 = vunpack.c.l.b16 %v24
    %v68 = vunpack.c.l.b16 %v25
    %v69 = vunpack.c.l.b16 %v26
    %v70 = vunpack.c.l.b16 %v27
    %v71 = vunpack.c.l.b16 %v28
    %v72 = vunpack.c.l.b16 %v29
    %v73 = vunpack.c.l.b16 %v30
    %v74 = vunpack.c.l.b16 %v31
    %v75 = vpack.c.b16 %v60, %v59
    %v76 = vpack.c.b16 %v62, %v61
    %v77 = vpack.c.b16 %v64, %v63
    %v78 = vpack.c.b16 %v66, %v65
    %v79 = vpack.c.b16 %v68, %v67
    %v80 = vpack.c.b16 %v70, %v69
    %v81 = vpack.c.b16 %v72, %v71
    %v82 = vpack.c.b16 %v74, %v73
    %v87 = vunpack.c.l.b16 %v32
    %v88 = vunpack.c.l.b16 %v33
    %v89 = vunpack.c.l.b16 %v34
    %v90 = vunpack.c.l.b16 %v35
    %v91 = vpack.c.b16 %v88, %v87
    %v92 = vpack.c.b16 %v90, %v89
    %vm95 = vcmask 261120
    %v97 = vsel %vm95, %v75, 0
    %v100 = vsel %vm95, %v76, 0
    %v103 = vsel %vm95, %v77, 0
    %v106 = vsel %vm95, %v78, 0
    %v109 = vsel %vm95, %v79, 0
    %v112 = vsel %vm95, %v80, 0
    %v115 = vsel %vm95, %v81, 0
    %v118 = vsel %vm95, %v82, 0
    %120 = vmatprep.subr.bf16.mxu0 0
    %121 = vmatpush1.bf16.msra.mxu0 %v91
    %122 = vmatprep.subr.bf16.mxu0 0
    %123 = vmatpush1.bf16.msra.mxu0 %v92
    %124 = vmatprep.subr.bf16.mxu0 0
    %125 = vmatpush1.bf16.msra.mxu0 0
    %126 = vmatprep.subr.bf16.mxu0 0
    %127 = vmatpush1.bf16.msra.mxu0 0
    %128 = vmatprep.subr.bf16.mxu0 0
    %129 = vmatpush1.bf16.msra.mxu0 0
    %130 = vmatprep.subr.bf16.mxu0 0
    %131 = vmatpush1.bf16.msra.mxu0 0
    %132 = vmatprep.subr.bf16.mxu0 0
    %133 = vmatpush1.bf16.msra.mxu0 0
    %134 = vmatprep.subr.bf16.mxu0 0
    %135 = vmatpush1.bf16.msra.mxu0 0
    %136 = vmatprep.subr.bf16.mxu0 0
    %137 = vmatpush1.bf16.msra.mxu0 0
    %138 = vmatprep.subr.bf16.mxu0 0
    %139 = vmatpush1.bf16.msra.mxu0 0
    %140 = vmatprep.subr.bf16.mxu0 0
    %141 = vmatpush1.bf16.msra.mxu0 0
    %142 = vmatprep.subr.bf16.mxu0 0
    %143 = vmatpush1.bf16.msra.mxu0 0
    %144 = vmatprep.subr.bf16.mxu0 0
    %145 = vmatpush1.bf16.msra.mxu0 0
    %146 = vmatprep.subr.bf16.mxu0 0
    %147 = vmatpush1.bf16.msra.mxu0 0
    %148 = vmatprep.subr.bf16.mxu0 0
    %149 = vmatpush1.bf16.msra.mxu0 0
    %150 = vmatprep.subr.bf16.mxu0 0
    %151 = vmatpush1.bf16.msra.mxu0 0
    %152 = vmatprep.mubr.bf16.mxu0 0
    %153 = vmatmul.mubr.bf16.gmra.mrb[0].mxu0 %v97
    %v154 = vpop.f32.mrb[0].mxu0
    %v155 = vadd.f32 %v41, %v154
    %v156 = vpop.f32.mrb[0].mxu0
    %v157 = vpop.f32.mrb[0].mxu0
    %v158 = vadd.f32 %v41, %v157
    %v159 = vpop.f32.mrb[0].mxu0
    %160 = vmatprep.mubr.bf16.mxu0 0
    %161 = vmatmul.mubr.bf16.gmra.mrb[0].mxu0 %v100
    %v162 = vpop.f32.mrb[0].mxu0
    %v163 = vadd.f32 %v41, %v162
    %v164 = vpop.f32.mrb[0].mxu0
    %v165 = vpop.f32.mrb[0].mxu0
    %v166 = vadd.f32 %v41, %v165
    %v167 = vpop.f32.mrb[0].mxu0
    %168 = vmatprep.mubr.bf16.mxu0 0
    %169 = vmatmul.mubr.bf16.gmra.mrb[0].mxu0 %v103
    %v170 = vpop.f32.mrb[0].mxu0
    %v171 = vadd.f32 %v41, %v170
    %v172 = vpop.f32.mrb[0].mxu0
    %v173 = vpop.f32.mrb[0].mxu0
    %v174 = vadd.f32 %v41, %v173
    %v175 = vpop.f32.mrb[0].mxu0
    %176 = vmatprep.mubr.bf16.mxu0 0
    %177 = vmatmul.mubr.bf16.gmra.mrb[0].mxu0 %v106
    %v178 = vpop.f32.mrb[0].mxu0
    %v179 = vadd.f32 %v41, %v178
    %v180 = vpop.f32.mrb[0].mxu0
    %v181 = vpop.f32.mrb[0].mxu0
    %v182 = vadd.f32 %v41, %v181
    %v183 = vpop.f32.mrb[0].mxu0
    %184 = vmatprep.mubr.bf16.mxu0 0
    %185 = vmatmul.mubr.bf16.gmra.mrb[0].mxu0 %v109
    %v186 = vpop.f32.mrb[0].mxu0
    %v187 = vadd.f32 %v41, %v186
    %v188 = vpop.f32.mrb[0].mxu0
    %v189 = vpop.f32.mrb[0].mxu0
    %v190 = vadd.f32 %v41, %v189
    %v191 = vpop.f32.mrb[0].mxu0
    %192 = vmatprep.mubr.bf16.mxu0 0
    %193 = vmatmul.mubr.bf16.gmra.mrb[0].mxu0 %v112
    %v194 = vpop.f32.mrb[0].mxu0
    %v195 = vadd.f32 %v41, %v194
    %v196 = vpop.f32.mrb[0].mxu0
    %v197 = vpop.f32.mrb[0].mxu0
    %v198 = vadd.f32 %v41, %v197
    %v199 = vpop.f32.mrb[0].mxu0
    %200 = vmatprep.mubr.bf16.mxu0 0
    %201 = vmatmul.mubr.bf16.gmra.mrb[0].mxu0 %v115
    %v202 = vpop.f32.mrb[0].mxu0
    %v203 = vadd.f32 %v41, %v202
    %v204 = vpop.f32.mrb[0].mxu0
    %v205 = vpop.f32.mrb[0].mxu0
    %v206 = vadd.f32 %v41, %v205
    %v207 = vpop.f32.mrb[0].mxu0
    %208 = vmatprep.mubr.bf16.mxu0 0
    %209 = vmatmul.mubr.bf16.gmra.mrb[0].mxu0 %v118
    %v210 = vpop.f32.mrb[0].mxu0
    %v211 = vadd.f32 %v41, %v210
    %v212 = vpop.f32.mrb[0].mxu0
    %v213 = vpop.f32.mrb[0].mxu0
    %v214 = vadd.f32 %v41, %v213
    %v215 = vpop.f32.mrb[0].mxu0
    %216 = vdwg.mxu0
    %s217 = smul.u32 0, 128
    %v218 = vlaneseq
    %v219 = vshrl.u32 %v218, 7
    %v220 = vadd.s32 %v219, 8
    %v221 = vadd.s32 %v219, 16
    %v222 = vadd.s32 %v219, 24
    %v223 = vadd.s32 %v219, 32
    %v224 = vadd.s32 %v219, 40
    %v225 = vadd.s32 %v219, 48
    %v226 = vadd.s32 %v219, 56
    %v227 = vadd.s32 %v219, 64
    %v228 = vadd.s32 %v219, 72
    %v229 = vadd.s32 %v219, 80
    %v230 = vadd.s32 %v219, 88
    %v231 = vadd.s32 %v219, 96
    %v232 = vadd.s32 %v219, 104
    %v233 = vadd.s32 %v219, 112
    %v234 = vadd.s32 %v219, 120
    %v235 = vstv %s217
    %v236 = vadd.s32 %v235, %v219
    %v237 = vadd.s32 %v235, %v220
    %v238 = vadd.s32 %v235, %v221
    %v239 = vadd.s32 %v235, %v222
    %v240 = vadd.s32 %v235, %v223
    %v241 = vadd.s32 %v235, %v224
    %v242 = vadd.s32 %v235, %v225
    %v243 = vadd.s32 %v235, %v226
    %v244 = vadd.s32 %v235, %v227
    %v245 = vadd.s32 %v235, %v228
    %v246 = vadd.s32 %v235, %v229
    %v247 = vadd.s32 %v235, %v230
    %v248 = vadd.s32 %v235, %v231
    %v249 = vadd.s32 %v235, %v232
    %v250 = vadd.s32 %v235, %v233
    %v251 = vadd.s32 %v235, %v234
    %vm252 = vcmp.lt.s32.totalorder %v236, 64
    %vm253 = vcmp.lt.s32.totalorder %v237, 64
    %vm254 = vcmp.lt.s32.totalorder %v238, 64
    %vm255 = vcmp.lt.s32.totalorder %v239, 64
    %vm256 = vcmp.lt.s32.totalorder %v240, 64
    %vm257 = vcmp.lt.s32.totalorder %v241, 64
    %vm258 = vcmp.lt.s32.totalorder %v242, 64
    %vm259 = vcmp.lt.s32.totalorder %v243, 64
    %vm260 = vcmp.lt.s32.totalorder %v244, 64
    %vm261 = vcmp.lt.s32.totalorder %v245, 64
    %vm262 = vcmp.lt.s32.totalorder %v246, 64
    %vm263 = vcmp.lt.s32.totalorder %v247, 64
    %vm264 = vcmp.lt.s32.totalorder %v248, 64
    %vm265 = vcmp.lt.s32.totalorder %v249, 64
    %vm266 = vcmp.lt.s32.totalorder %v250, 64
    %vm267 = vcmp.lt.s32.totalorder %v251, 64
    %v268 = vsel %vm252, %v155, 0.0
    %v269 = vsel %vm253, %v158, 0.0
    %v270 = vsel %vm254, %v163, 0.0
    %v271 = vsel %vm255, %v166, 0.0
    %v272 = vsel %vm256, %v171, 0.0
    %v273 = vsel %vm257, %v174, 0.0
    %v274 = vsel %vm258, %v179, 0.0
    %v275 = vsel %vm259, %v182, 0.0
    %v276 = vsel %vm260, %v187, 0.0
    %v277 = vsel %vm261, %v190, 0.0
    %v278 = vsel %vm262, %v195, 0.0
    %v279 = vsel %vm263, %v198, 0.0
    %v280 = vsel %vm264, %v203, 0.0
    %v281 = vsel %vm265, %v206, 0.0
    %v282 = vsel %vm266, %v211, 0.0
    %v283 = vsel %vm267, %v214, 0.0
    %v284 = vpack.c.bf16 %v269, %v268
    %v285 = vpack.c.bf16 %v271, %v270
    %v286 = vpack.c.bf16 %v273, %v272
    %v287 = vpack.c.bf16 %v275, %v274
    %v288 = vpack.c.bf16 %v277, %v276
    %v289 = vpack.c.bf16 %v279, %v278
    %v290 = vpack.c.bf16 %v281, %v280
    %v291 = vpack.c.bf16 %v283, %v282
    %v300 = vunpack.c.l.b16 %v284
    %v301 = vunpack.c.h.b16 %v284
    %v302 = vunpack.c.l.b16 %v285
    %v303 = vunpack.c.h.b16 %v285
    %v304 = vunpack.c.l.b16 %v286
    %v305 = vunpack.c.h.b16 %v286
    %v306 = vunpack.c.l.b16 %v287
    %v307 = vunpack.c.h.b16 %v287
    %v308 = vunpack.c.l.b16 %v288
    %v309 = vunpack.c.h.b16 %v288
    %v310 = vunpack.c.l.b16 %v289
    %v311 = vunpack.c.h.b16 %v289
    %v312 = vunpack.c.l.b16 %v290
    %v313 = vunpack.c.h.b16 %v290
    %v314 = vunpack.c.l.b16 %v291
    %v315 = vunpack.c.h.b16 %v291
    %v316 = vpack.c.b16 %v300, %v300
    %v317 = vpack.c.b16 %v301, %v301
    %v318 = vpack.c.b16 %v302, %v302
    %v319 = vpack.c.b16 %v303, %v303
    %v320 = vpack.c.b16 %v304, %v304
    %v321 = vpack.c.b16 %v305, %v305
    %v322 = vpack.c.b16 %v306, %v306
    %v323 = vpack.c.b16 %v307, %v307
    %v324 = vpack.c.b16 %v308, %v308
    %v325 = vpack.c.b16 %v309, %v309
    %v326 = vpack.c.b16 %v310, %v310
    %v327 = vpack.c.b16 %v311, %v311
    %v328 = vpack.c.b16 %v312, %v312
    %v329 = vpack.c.b16 %v313, %v313
    %v330 = vpack.c.b16 %v314, %v314
    %v331 = vpack.c.b16 %v315, %v315
    %348 = vst [vmem:[#allocation2] sm:$0xf] %v316
    %349 = vst [vmem:[#allocation2 + $0x4] sm:$0xf] %v317
    %350 = vst [vmem:[#allocation2 + $0x8] sm:$0xf] %v318
    %351 = vst [vmem:[#allocation2 + $0xc] sm:$0xf] %v319
    %352 = vst [vmem:[#allocation2 + $0x10] sm:$0xf] %v320
    %353 = vst [vmem:[#allocation2 + $0x14] sm:$0xf] %v321
    %354 = vst [vmem:[#allocation2 + $0x18] sm:$0xf] %v322
    %355 = vst [vmem:[#allocation2 + $0x1c] sm:$0xf] %v323
    %356 = vst [vmem:[#allocation2 + $0x20] sm:$0xf] %v324
    %357 = vst [vmem:[#allocation2 + $0x24] sm:$0xf] %v325
    %358 = vst [vmem:[#allocation2 + $0x28] sm:$0xf] %v326
    %359 = vst [vmem:[#allocation2 + $0x2c] sm:$0xf] %v327
    %360 = vst [vmem:[#allocation2 + $0x30] sm:$0xf] %v328
    %361 = vst [vmem:[#allocation2 + $0x34] sm:$0xf] %v329
    %362 = vst [vmem:[#allocation2 + $0x38] sm:$0xf] %v330
    %363 = vst [vmem:[#allocation2 + $0x3c] sm:$0xf] %v331
    // Predicated region
    $region14: #{tpu_custom_call.1} parent=1 // pred_check
      _
    $region15: #{tpu_custom_call.1} parent=1 // pred_check_branch
      %365 = sbr.rel (0) target = $region17
    $region16: #{tpu_custom_call.1} parent=1 // pred_region
      %s367 = ssub.s32 1024, 1024
      %368 = vsyncadd [#allocation3], %s367
      %s369 = sshll.u32 [#allocation2], 4
      %s370 = int_to_ptr.vmem [resolvable:$true] %s369
      %375 = dma.vmem_to_hbm [thread:$0]  %s370, 1024, %s3, [#allocation3], 64, 64, 4
    $region17: #{tpu_custom_call.1} parent=1 // pred_fallthru
      _
    // Predicated region
    $region18: #{tpu_custom_call.1} parent=1 // pred_check
      _
    $region19: #{tpu_custom_call.1} parent=1 // pred_check_branch
      %377 = sbr.rel (0) target = $region21
    $region20: #{tpu_custom_call.1} parent=1 // pred_region
      %378 = dma.done [#allocation3], 1024
    $region21: #{tpu_custom_call.1} parent=1 // pred_fallthru
      _
    %379 = vsyncpa [#allocation3], 1

</llo_original>
